<compile_context>
chip_gen: v6e
topology: v6e:2x2x1
jax: 0.10.0
libtpu: 0.0.40
codegen_flags: <defaults>
</compile_context>

<pallas_src>
import functools

import jax
import jax.numpy as jnp
from jax.experimental import pallas as pl
from jax.experimental.pallas import tpu as pltpu

EPS = 1e-9
BN_EPS = 1e-5
LANE = 128


def _encoder_b_kernel(x_ref, w1_ref, w2_ref, w3_ref, bn_ref, b3_ref, out_ref, *, z_pad):
    # Packed BN affine params: rows = [g1, be1, g2, be2], each (1, H).
    bn = bn_ref[...]
    g1, be1 = bn[0:1, :], bn[1:2, :]
    g2, be2 = bn[2:3, :], bn[3:4, :]

    # ---- Linear 1 (bias cancelled by train-mode BN) + BN1d + ReLU ----
    h = jnp.dot(x_ref[...], w1_ref[...], preferred_element_type=jnp.float32)
    mean = jnp.mean(h, axis=0, keepdims=True)
    d = h - mean
    var = jnp.mean(d * d, axis=0, keepdims=True)          # centered two-pass variance
    h = jnp.maximum(d * (g1 * jax.lax.rsqrt(var + BN_EPS)) + be1, 0.0)

    # ---- Linear 2: int8-stored weight, up-converted to bf16 for the MXU.
    #      The per-column dequant scale is cancelled by the BN below, so it is
    #      never applied (and never stored).  Bias cancelled by BN as well.
    w2 = w2_ref[...].astype(jnp.float32).astype(jnp.bfloat16)
    h = jnp.dot(h.astype(jnp.bfloat16), w2, preferred_element_type=jnp.float32)
    mean = jnp.mean(h, axis=0, keepdims=True)
    d = h - mean
    var = jnp.mean(d * d, axis=0, keepdims=True)
    h = jnp.maximum(d * (g2 * jax.lax.rsqrt(var + BN_EPS)) + be2, 0.0)

    # ---- Fused, lane-padded head: lanes [0, z_pad) = mu, [z_pad, 2*z_pad) = logvar.
    stats = (
        jnp.dot(h.astype(jnp.bfloat16), w3_ref[...], preferred_element_type=jnp.float32)
        + b3_ref[...]
    )
    mu = stats[:, :z_pad]
    logvar = stats[:, z_pad:]

    # ---- Product of experts with the unit-Gaussian prior ----
    var_z = jnp.exp(logvar) + EPS
    denom = 1.0 + var_z
    inv = pl.reciprocal(denom, approx=True)       # EUP slot (essentially free)
    inv = inv * (2.0 - denom * inv)               # one Newton step -> f32-exact
    out_ref[0, :, :] = mu * inv                   # mu_poe   (lane-dense store)
    out_ref[1, :, :] = jnp.sqrt(var_z * inv)      # std_poe  (lane-dense store)


def encoder_b_forward(attributes, params, *, z_dim):
    """attributes: (B, num_attr) float. Returns (mu_poe, std_poe), each (1, B, z_dim)."""
    B, A = attributes.shape
    H = params["w2"].shape[0]
    z_pad = params["w3"].shape[1] // 2

    vmem = pl.BlockSpec(memory_space=pltpu.MemorySpace.VMEM)

    weight_bytes = (
        params["w1"].size * params["w1"].dtype.itemsize
        + params["w2"].size * params["w2"].dtype.itemsize
        + params["w3"].size * params["w3"].dtype.itemsize
        + params["bn"].size * 4
        + params["b3"].size * 4
    )
    cost = pl.CostEstimate(
        flops=2 * B * (A * H + H * H + H * 2 * z_pad),
        bytes_accessed=int(weight_bytes + B * A * 2 + 2 * B * z_pad * 4),
        transcendentals=int(B * 2 * z_pad + 2 * H),
    )

    out = pl.pallas_call(
        functools.partial(_encoder_b_kernel, z_pad=z_pad),
        out_shape=jax.ShapeDtypeStruct((2, B, z_pad), jnp.float32),
        in_specs=[vmem] * 6,
        out_specs=vmem,
        cost_estimate=cost,
    )(
        attributes.astype(jnp.bfloat16),   # {0,1} attributes are exact in bf16
        params["w1"], params["w2"], params["w3"],
        params["bn"], params["b3"],
    )

    # Leading axis of the slab is the torch .unsqueeze(0); one lane slice to z_dim.
    mu_poe = out[0:1, :, :z_dim]
    std_poe = out[1:2, :, :z_dim]
    return mu_poe, std_poe


def make_params(key, num_attr=18, num_hidden=512, z_dim=18):
    """Kaiming-normal linears; w1/w3 stored bf16, w2 stored int8 (scale cancels in BN).

    Linear biases b1/b2 are omitted: a per-feature constant added before
    train-mode BatchNorm is exactly cancelled by the batch-mean subtraction.
    The head weight/bias is zero-padded to lane-multiple width: columns
    [0, z_dim) hold the mu head, [z_pad, z_pad + z_dim) the logvar head.
    """
    z_pad = ((z_dim + LANE - 1) // LANE) * LANE
    k1, k2, k3 = jax.random.split(key, 3)

    def kaiming(k, fan_in, fan_out):
        return jax.random.normal(k, (fan_in, fan_out), jnp.float32) * jnp.sqrt(2.0 / fan_in)

    # w2: per-output-column symmetric int8 quantization.  The (positive) scale
    # is NOT stored: train-mode BatchNorm normalizes each hidden feature by its
    # own batch mean/std, so the per-column scale of w2 cancels exactly.
    w2_f32 = kaiming(k2, num_hidden, num_hidden)
    col_scale = jnp.maximum(jnp.max(jnp.abs(w2_f32), axis=0, keepdims=True), 1e-12) / 127.0
    w2_i8 = jnp.clip(jnp.round(w2_f32 / col_scale), -127.0, 127.0).astype(jnp.int8)

    w3_raw = kaiming(k3, num_hidden, 2 * z_dim)
    w3 = jnp.zeros((num_hidden, 2 * z_pad), jnp.float32)
    w3 = w3.at[:, :z_dim].set(w3_raw[:, :z_dim])
    w3 = w3.at[:, z_pad:z_pad + z_dim].set(w3_raw[:, z_dim:])

    bn = jnp.concatenate(
        [
            jnp.ones((1, num_hidden), jnp.float32),   # g1
            jnp.zeros((1, num_hidden), jnp.float32),  # be1
            jnp.ones((1, num_hidden), jnp.float32),   # g2
            jnp.zeros((1, num_hidden), jnp.float32),  # be2
        ],
        axis=0,
    )

    return {
        "w1": kaiming(k1, num_attr, num_hidden).astype(jnp.bfloat16),
        "w2": w2_i8,
        "w3": w3.astype(jnp.bfloat16),
        "bn": bn,
        "b3": jnp.zeros((1, 2 * z_pad), jnp.float32),  # head bias (zeros at init), padded layout
    }


if __name__ == "__main__":
    key = jax.random.PRNGKey(0)
    k_param, k_attr = jax.random.split(key)

    B, NUM_ATTR, NUM_HIDDEN, Z_DIM = 8, 18, 512, 18
    params = make_params(k_param, NUM_ATTR, NUM_HIDDEN, Z_DIM)

    # attributes are binary-ish CelebA attribute vectors; use {0,1} floats
    attributes = jax.random.bernoulli(k_attr, 0.5, (B, NUM_ATTR)).astype(jnp.float32)

    fwd = jax.jit(encoder_b_forward, static_argnames="z_dim")
    mu_poe, std_poe = fwd(attributes, params, z_dim=Z_DIM)
    jax.block_until_ready((mu_poe, std_poe))

    assert mu_poe.shape == (1, B, Z_DIM) and std_poe.shape == (1, B, Z_DIM)
    assert bool(jnp.all(jnp.isfinite(mu_poe))) and bool(jnp.all(std_poe > 0))
    print("KERNEL_OK")
</pallas_src>

<mosaic_0001>
module attributes {stable_mosaic.version = 11 : i64} {
  func.func @_encoder_b_kernel(%arg0: memref<8x18xbf16, #tpu.memory_space<vmem>>, %arg1: memref<18x512xbf16, #tpu.memory_space<vmem>>, %arg2: memref<512x512xi8, #tpu.memory_space<vmem>>, %arg3: memref<512x256xbf16, #tpu.memory_space<vmem>>, %arg4: memref<4x512xf32, #tpu.memory_space<vmem>>, %arg5: memref<1x256xf32, #tpu.memory_space<vmem>>, %arg6: memref<2x8x128xf32, #tpu.memory_space<vmem>>) attributes {dimension_semantics = [], scalar_prefetch = 0 : i64, scratch_operands = 0 : i64, tpu.core_type = #tpu.core_type<tc>} {
    %c0 = arith.constant 0 : index
    %c0_0 = arith.constant 0 : index
    %0 = vector.load %arg4[%c0, %c0_0] : memref<4x512xf32, #tpu.memory_space<vmem>>, vector<4x512xf32>
    %1 = vector.extract_strided_slice %0 {offsets = [0, 0], sizes = [1, 512], strides = [1, 1]} : vector<4x512xf32> to vector<1x512xf32>
    %2 = vector.extract_strided_slice %0 {offsets = [1, 0], sizes = [1, 512], strides = [1, 1]} : vector<4x512xf32> to vector<1x512xf32>
    %3 = vector.extract_strided_slice %0 {offsets = [2, 0], sizes = [1, 512], strides = [1, 1]} : vector<4x512xf32> to vector<1x512xf32>
    %4 = vector.extract_strided_slice %0 {offsets = [3, 0], sizes = [1, 512], strides = [1, 1]} : vector<4x512xf32> to vector<1x512xf32>
    %c0_1 = arith.constant 0 : index
    %c0_2 = arith.constant 0 : index
    %5 = vector.load %arg0[%c0_1, %c0_2] : memref<8x18xbf16, #tpu.memory_space<vmem>>, vector<8x18xbf16>
    %c0_3 = arith.constant 0 : index
    %c0_4 = arith.constant 0 : index
    %6 = vector.load %arg1[%c0_3, %c0_4] : memref<18x512xbf16, #tpu.memory_space<vmem>>, vector<18x512xbf16>
    %cst = arith.constant dense<0.000000e+00> : vector<8x512xf32>
    %7 = tpu.matmul %5, %6, %cst {dimension_numbers = #tpu.dot_dimension_numbers<[1], [0], [0], [1], [0, 0, 1, 1], [], []>} : vector<8x18xbf16>, vector<18x512xbf16>, vector<8x512xf32> -> vector<8x512xf32>
    %cst_5 = arith.constant dense<0.000000e+00> : vector<512xf32>
    %8 = vector.multi_reduction <add>, %7, %cst_5 [0] : vector<8x512xf32> to vector<512xf32>
    %9 = vector.shape_cast %8 : vector<512xf32> to vector<1x512xf32>
    %cst_6 = arith.constant 8.000000e+00 : f32
    %10 = vector.broadcast %cst_6 : f32 to vector<1x512xf32>
    %11 = arith.divf %9, %10 : vector<1x512xf32>
    %12 = vector.broadcast %11 : vector<1x512xf32> to vector<8x512xf32>
    %13 = arith.subf %7, %12 : vector<8x512xf32>
    %14 = arith.mulf %13, %13 : vector<8x512xf32>
    %cst_7 = arith.constant dense<0.000000e+00> : vector<512xf32>
    %15 = vector.multi_reduction <add>, %14, %cst_7 [0] : vector<8x512xf32> to vector<512xf32>
    %16 = vector.shape_cast %15 : vector<512xf32> to vector<1x512xf32>
    %cst_8 = arith.constant 8.000000e+00 : f32
    %17 = vector.broadcast %cst_8 : f32 to vector<1x512xf32>
    %18 = arith.divf %16, %17 : vector<1x512xf32>
    %cst_9 = arith.constant 9.99999974E-6 : f32
    %19 = vector.broadcast %cst_9 : f32 to vector<1x512xf32>
    %20 = arith.addf %18, %19 : vector<1x512xf32>
    %21 = math.rsqrt %20 : vector<1x512xf32>
    %22 = arith.mulf %1, %21 : vector<1x512xf32>
    %23 = vector.broadcast %22 : vector<1x512xf32> to vector<8x512xf32>
    %24 = arith.mulf %13, %23 : vector<8x512xf32>
    %25 = vector.broadcast %2 : vector<1x512xf32> to vector<8x512xf32>
    %26 = arith.addf %24, %25 : vector<8x512xf32>
    %cst_10 = arith.constant 0.000000e+00 : f32
    %27 = vector.broadcast %cst_10 : f32 to vector<8x512xf32>
    %28 = arith.maximumf %26, %27 : vector<8x512xf32>
    %c0_11 = arith.constant 0 : index
    %c0_12 = arith.constant 0 : index
    %29 = vector.load %arg2[%c0_11, %c0_12] : memref<512x512xi8, #tpu.memory_space<vmem>>, vector<512x512xi8>
    %30 = arith.sitofp %29 : vector<512x512xi8> to vector<512x512xf32>
    %31 = arith.truncf %30 : vector<512x512xf32> to vector<512x512xbf16>
    %32 = arith.truncf %28 : vector<8x512xf32> to vector<8x512xbf16>
    %cst_13 = arith.constant dense<0.000000e+00> : vector<8x512xf32>
    %33 = tpu.matmul %32, %31, %cst_13 {dimension_numbers = #tpu.dot_dimension_numbers<[1], [0], [0], [1], [0, 0, 1, 1], [], []>} : vector<8x512xbf16>, vector<512x512xbf16>, vector<8x512xf32> -> vector<8x512xf32>
    %cst_14 = arith.constant dense<0.000000e+00> : vector<512xf32>
    %34 = vector.multi_reduction <add>, %33, %cst_14 [0] : vector<8x512xf32> to vector<512xf32>
    %35 = vector.shape_cast %34 : vector<512xf32> to vector<1x512xf32>
    %cst_15 = arith.constant 8.000000e+00 : f32
    %36 = vector.broadcast %cst_15 : f32 to vector<1x512xf32>
    %37 = arith.divf %35, %36 : vector<1x512xf32>
    %38 = vector.broadcast %37 : vector<1x512xf32> to vector<8x512xf32>
    %39 = arith.subf %33, %38 : vector<8x512xf32>
    %40 = arith.mulf %39, %39 : vector<8x512xf32>
    %cst_16 = arith.constant dense<0.000000e+00> : vector<512xf32>
    %41 = vector.multi_reduction <add>, %40, %cst_16 [0] : vector<8x512xf32> to vector<512xf32>
    %42 = vector.shape_cast %41 : vector<512xf32> to vector<1x512xf32>
    %cst_17 = arith.constant 8.000000e+00 : f32
    %43 = vector.broadcast %cst_17 : f32 to vector<1x512xf32>
    %44 = arith.divf %42, %43 : vector<1x512xf32>
    %cst_18 = arith.constant 9.99999974E-6 : f32
    %45 = vector.broadcast %cst_18 : f32 to vector<1x512xf32>
    %46 = arith.addf %44, %45 : vector<1x512xf32>
    %47 = math.rsqrt %46 : vector<1x512xf32>
    %48 = arith.mulf %3, %47 : vector<1x512xf32>
    %49 = vector.broadcast %48 : vector<1x512xf32> to vector<8x512xf32>
    %50 = arith.mulf %39, %49 : vector<8x512xf32>
    %51 = vector.broadcast %4 : vector<1x512xf32> to vector<8x512xf32>
    %52 = arith.addf %50, %51 : vector<8x512xf32>
    %cst_19 = arith.constant 0.000000e+00 : f32
    %53 = vector.broadcast %cst_19 : f32 to vector<8x512xf32>
    %54 = arith.maximumf %52, %53 : vector<8x512xf32>
    %55 = arith.truncf %54 : vector<8x512xf32> to vector<8x512xbf16>
    %c0_20 = arith.constant 0 : index
    %c0_21 = arith.constant 0 : index
    %56 = vector.load %arg3[%c0_20, %c0_21] : memref<512x256xbf16, #tpu.memory_space<vmem>>, vector<512x256xbf16>
    %cst_22 = arith.constant dense<0.000000e+00> : vector<8x256xf32>
    %57 = tpu.matmul %55, %56, %cst_22 {dimension_numbers = #tpu.dot_dimension_numbers<[1], [0], [0], [1], [0, 0, 1, 1], [], []>} : vector<8x512xbf16>, vector<512x256xbf16>, vector<8x256xf32> -> vector<8x256xf32>
    %c0_23 = arith.constant 0 : index
    %c0_24 = arith.constant 0 : index
    %58 = vector.load %arg5[%c0_23, %c0_24] : memref<1x256xf32, #tpu.memory_space<vmem>>, vector<1x256xf32>
    %59 = vector.broadcast %58 : vector<1x256xf32> to vector<8x256xf32>
    %60 = arith.addf %57, %59 : vector<8x256xf32>
    %61 = vector.extract_strided_slice %60 {offsets = [0, 0], sizes = [8, 128], strides = [1, 1]} : vector<8x256xf32> to vector<8x128xf32>
    %62 = vector.extract_strided_slice %60 {offsets = [0, 128], sizes = [8, 128], strides = [1, 1]} : vector<8x256xf32> to vector<8x128xf32>
    %63 = math.exp %62 : vector<8x128xf32>
    %cst_25 = arith.constant 9.99999971E-10 : f32
    %64 = vector.broadcast %cst_25 : f32 to vector<8x128xf32>
    %65 = arith.addf %63, %64 : vector<8x128xf32>
    %cst_26 = arith.constant 1.000000e+00 : f32
    %66 = vector.broadcast %cst_26 : f32 to vector<8x128xf32>
    %67 = arith.addf %66, %65 : vector<8x128xf32>
    %68 = tpu.reciprocal %67 {approx = true} : vector<8x128xf32> -> vector<8x128xf32>
    %69 = arith.mulf %67, %68 : vector<8x128xf32>
    %cst_27 = arith.constant 2.000000e+00 : f32
    %70 = vector.broadcast %cst_27 : f32 to vector<8x128xf32>
    %71 = arith.subf %70, %69 : vector<8x128xf32>
    %72 = arith.mulf %68, %71 : vector<8x128xf32>
    %73 = arith.mulf %61, %72 : vector<8x128xf32>
    %c0_28 = arith.constant 0 : index
    %c0_29 = arith.constant 0 : index
    %c0_30 = arith.constant 0 : index
    %74 = vector.load %arg6[%c0_28, %c0_29, %c0_30] : memref<2x8x128xf32, #tpu.memory_space<vmem>>, vector<1x8x128xf32>
    %75 = vector.shape_cast %74 : vector<1x8x128xf32> to vector<8x128xf32>
    %76 = vector.shape_cast %73 : vector<8x128xf32> to vector<1x8x128xf32>
    tpu.vector_store %arg6[%c0_28, %c0_29, %c0_30], %76 {strides = array<i32>} : memref<2x8x128xf32, #tpu.memory_space<vmem>>, vector<1x8x128xf32>,
    %77 = arith.mulf %65, %72 : vector<8x128xf32>
    %78 = math.sqrt %77 : vector<8x128xf32>
    %c1 = arith.constant 1 : index
    %c0_31 = arith.constant 0 : index
    %c0_32 = arith.constant 0 : index
    %79 = vector.load %arg6[%c1, %c0_31, %c0_32] : memref<2x8x128xf32, #tpu.memory_space<vmem>>, vector<1x8x128xf32>
    %80 = vector.shape_cast %79 : vector<1x8x128xf32> to vector<8x128xf32>
    %81 = vector.shape_cast %78 : vector<8x128xf32> to vector<1x8x128xf32>
    tpu.vector_store %arg6[%c1, %c0_31, %c0_32], %81 {strides = array<i32>} : memref<2x8x128xf32, #tpu.memory_space<vmem>>, vector<1x8x128xf32>,
    return
  }
}

</mosaic_0001>

<llo_original>
// kernel: encoder_b_forward.1
$region0: #{encoder_b_forward.1}
  #allocation0 [shape = 'u32[]', space=smem, size = 0x4, offset = 0x4, fixed_abs, tag = 'smem constant byte address 0x4 - core index']
  #allocation1 [shape = 'u32[144,128]{1,0:T(1,128)}', space=vmem, size = 0x12000, scoped, tag = 'internal scratch']
  %s0 = inlined_call_operand.vmem [shape: bf16[8,18], index: 0, kind: input, shape index: {}]
  %s1 = inlined_call_operand.hbm [shape: bf16[18,512], index: 1, kind: input, shape index: {}]
  %s2 = inlined_call_operand.hbm [shape: s8[512,512], index: 2, kind: input, shape index: {}]
  %s3 = inlined_call_operand.hbm [shape: bf16[512,256], index: 3, kind: input, shape index: {}]
  %s4 = inlined_call_operand.hbm [shape: f32[4,512], index: 4, kind: input, shape index: {}]
  %s5 = inlined_call_operand.vmem [shape: f32[1,256], index: 5, kind: input, shape index: {}]
  %s6 = inlined_call_operand.vmem [shape: f32[2,8,128], index: 6, kind: output, shape index: {}]
  %s7 = sld [smem:[#allocation0]]
  $region50: #{encoder_b_forward.1} parent=0
    _
  %s9 = ssub.s32 1, %s7
  %s10 = scalar_select 0, %s9, %s7
  $region1: #{encoder_b_forward.1} parent=0
    #allocation2 [shape = 'u8[24576]{0}', space=vmem, size = 0x6000, scoped, tag = 'input window, operand 1, single buffered']
    #allocation3 [shape = 's32[1]{0}', space=sflag, size = 0x4, scoped, tag = 'scoped memory for encoder_b_forward.1']
    #allocation4 [shape = 'u8[262144]{0}', space=vmem, size = 0x40000, scoped, tag = 'input window, operand 2, single buffered']
    #allocation5 [shape = 's32[1]{0}', space=sflag, size = 0x4, scoped, tag = 'scoped memory for encoder_b_forward.1']
    #allocation6 [shape = 'u8[262144]{0}', space=vmem, size = 0x40000, scoped, tag = 'input window, operand 3, single buffered']
    #allocation7 [shape = 'u8[8192]{0}', space=vmem, size = 0x2000, scoped, tag = 'input window, operand 4, single buffered']
    #allocation8 [shape = 's32[1]{0}', space=sflag, size = 0x4, scoped, tag = 'scoped memory for encoder_b_forward.1']
    %11 = vsyncpa [#allocation3], 0
    %12 = vsyncpa [#allocation5], 0
    %13 = vsyncpa [#allocation8], 0
    // Predicated region
    $region2: #{encoder_b_forward.1} parent=1 // pred_check
      _
    $region3: #{encoder_b_forward.1} parent=1 // pred_check_branch
      %15 = sbr.rel (0) target = $region5
    $region4: #{encoder_b_forward.1} parent=1 // pred_region
      _
    $region5: #{encoder_b_forward.1} parent=1 // pred_fallthru
      _
    // Predicated region
    $region6: #{encoder_b_forward.1} parent=1 // pred_check
      _
    $region7: #{encoder_b_forward.1} parent=1 // pred_check_branch
      %17 = sbr.rel (0) target = $region9
    $region8: #{encoder_b_forward.1} parent=1 // pred_region
      %s19 = ssub.s32 768, 768
      %20 = vsyncadd [#allocation3], %s19
      %s21 = sshll.u32 [#allocation2], 4
      %s22 = int_to_ptr.vmem [resolvable:$true] %s21
      %27 = dma.hbm_to_vmem [thread:$0]  %s1, 768, %s22, [#allocation3], 256, 256, 16
    $region9: #{encoder_b_forward.1} parent=1 // pred_fallthru
      _
    // Predicated region
    $region10: #{encoder_b_forward.1} parent=1 // pred_check
      _
    $region11: #{encoder_b_forward.1} parent=1 // pred_check_branch
      %29 = sbr.rel (0) target = $region13
    $region12: #{encoder_b_forward.1} parent=1 // pred_region
      %s31 = ssub.s32 8192, 8192
      %32 = vsyncadd [#allocation5], %s31
      %s33 = sshll.u32 [#allocation4], 4
      %s34 = int_to_ptr.vmem [resolvable:$true] %s33
      %39 = dma.hbm_to_vmem [thread:$0]  %s2, 8192, %s34, [#allocation5], 512, 512, 32
    $region13: #{encoder_b_forward.1} parent=1 // pred_fallthru
      _
    // Predicated region
    $region14: #{encoder_b_forward.1} parent=1 // pred_check
      _
    $region15: #{encoder_b_forward.1} parent=1 // pred_check_branch
      %41 = sbr.rel (0) target = $region17
    $region16: #{encoder_b_forward.1} parent=1 // pred_region
      %s43 = ssub.s32 8192, 8192
      %44 = vsyncadd [#allocation5], %s43
      %s45 = sshll.u32 [#allocation6], 4
      %s46 = int_to_ptr.vmem [resolvable:$true] %s45
      %51 = dma.hbm_to_vmem [thread:$0]  %s3, 8192, %s46, [#allocation5], 128, 128, 8
    $region17: #{encoder_b_forward.1} parent=1 // pred_fallthru
      _
    // Predicated region
    $region18: #{encoder_b_forward.1} parent=1 // pred_check
      _
    $region19: #{encoder_b_forward.1} parent=1 // pred_check_branch
      %53 = sbr.rel (0) target = $region21
    $region20: #{encoder_b_forward.1} parent=1 // pred_region
      %s55 = ssub.s32 256, 256
      %56 = vsyncadd [#allocation8], %s55
      %s58 = sshll.u32 [#allocation7], 4
      %s59 = int_to_ptr.vmem [resolvable:$true] %s58
      %61 = dma.hbm_to_vmem [thread:$0]  %s4, 256, %s59, [#allocation8]
    $region21: #{encoder_b_forward.1} parent=1 // pred_fallthru
      _
    // Predicated region
    $region22: #{encoder_b_forward.1} parent=1 // pred_check
      _
    $region23: #{encoder_b_forward.1} parent=1 // pred_check_branch
      %63 = sbr.rel (0) target = $region25
    $region24: #{encoder_b_forward.1} parent=1 // pred_region
      _
    $region25: #{encoder_b_forward.1} parent=1 // pred_fallthru
      _
    // Predicated region
    $region26: #{encoder_b_forward.1} parent=1 // pred_check
      _
    $region27: #{encoder_b_forward.1} parent=1 // pred_check_branch
      %65 = sbr.rel (0) target = $region29
    $region28: #{encoder_b_forward.1} parent=1 // pred_region
      %66 = dma.done [#allocation3], 768
    $region29: #{encoder_b_forward.1} parent=1 // pred_fallthru
      _
    // Predicated region
    $region30: #{encoder_b_forward.1} parent=1 // pred_check
      _
    $region31: #{encoder_b_forward.1} parent=1 // pred_check_branch
      %68 = sbr.rel (0) target = $region33
    $region32: #{encoder_b_forward.1} parent=1 // pred_region
      %69 = dma.done [#allocation5], 8192
    $region33: #{encoder_b_forward.1} parent=1 // pred_fallthru
      _
    // Predicated region
    $region34: #{encoder_b_forward.1} parent=1 // pred_check
      _
    $region35: #{encoder_b_forward.1} parent=1 // pred_check_branch
      %71 = sbr.rel (0) target = $region37
    $region36: #{encoder_b_forward.1} parent=1 // pred_region
      %72 = dma.done [#allocation5], 8192
    $region37: #{encoder_b_forward.1} parent=1 // pred_fallthru
      _
    // Predicated region
    $region38: #{encoder_b_forward.1} parent=1 // pred_check
      _
    $region39: #{encoder_b_forward.1} parent=1 // pred_check_branch
      %74 = sbr.rel (0) target = $region41
    $region40: #{encoder_b_forward.1} parent=1 // pred_region
      %75 = dma.done [#allocation8], 256
    $region41: #{encoder_b_forward.1} parent=1 // pred_fallthru
      _
    %v77 = vld [vmem:[#allocation7] sm:$0xff]
    %v78 = vld [vmem:[#allocation7 + $0x8] sm:$0xff]
    %v79 = vld [vmem:[%s0] sm:$0xf]
    %v80 = vld [vmem:[#allocation2] sm:$0xff]
    %v81 = vld [vmem:[#allocation2 + $0x8] sm:$0xff]
    %v82 = vld [vmem:[#allocation2 + $0x10] sm:$0xff]
    %v83 = vld [vmem:[#allocation2 + $0x18] sm:$0xff]
    %v84 = vld [vmem:[#allocation2 + $0x20] sm:$0x11]
    %v85 = vld [vmem:[#allocation2 + $0x28] sm:$0x11]
    %v92 = vunpack.c.l.b16 %v80
    %v93 = vunpack.c.h.b16 %v80
    %v94 = vunpack.c.l.b16 %v81
    %v95 = vunpack.c.h.b16 %v81
    %v96 = vunpack.c.l.b16 %v82
    %v97 = vunpack.c.h.b16 %v82
    %v98 = vunpack.c.l.b16 %v83
    %v99 = vunpack.c.h.b16 %v83
    %v100 = vunpack.c.l.b16 %v84
    %v101 = vunpack.c.h.b16 %v84
    %v102 = vunpack.c.l.b16 %v85
    %v103 = vunpack.c.h.b16 %v85
    %v104 = vpack.c.b16 %v96, %v92
    %v105 = vpack.c.b16 %v97, %v93
    %v106 = vpack.c.b16 %v98, %v94
    %v107 = vpack.c.b16 %v99, %v95
    %v108 = vpack.c.b16 %v100, %v100
    %v109 = vpack.c.b16 %v101, %v101
    %v110 = vpack.c.b16 %v102, %v102
    %v111 = vpack.c.b16 %v103, %v103
    %vm116 = vcmask 146432
    %v118 = vsel %vm116, %v79, 0
    %vm120 = vcmask 1040384
    %v122 = vsel %vm120, %v108, 0
    %v125 = vsel %vm120, %v109, 0
    %v128 = vsel %vm120, %v110, 0
    %v131 = vsel %vm120, %v111, 0
    %133 = vmatprep.subr.bf16.mxu0 0
    %134 = vmatpush1.bf16.msra.mxu0 0
    %135 = vmatprep.subr.bf16.mxu0 0
    %136 = vmatpush1.bf16.msra.mxu0 0
    %137 = vmatprep.subr.bf16.mxu0 0
    %138 = vmatpush1.bf16.msra.mxu0 0
    %139 = vmatprep.subr.bf16.mxu0 0
    %140 = vmatpush1.bf16.msra.mxu0 0
    %141 = vmatprep.subr.bf16.mxu0 0
    %142 = vmatpush1.bf16.msra.mxu0 0
    %143 = vmatprep.subr.bf16.mxu0 0
    %144 = vmatpush1.bf16.msra.mxu0 0
    %145 = vmatprep.subr.bf16.mxu0 %v125
    %146 = vmatpush1.bf16.msra.mxu0 %v122
    %147 = vmatprep.subr.bf16.mxu0 %v105
    %148 = vmatpush1.bf16.msra.mxu0 %v104
    %149 = vmatprep.subr.bf16.mxu0 0
    %150 = vmatpush2.bf16.msra.mxu0 0
    %151 = vmatprep.subr.bf16.mxu0 0
    %152 = vmatpush2.bf16.msra.mxu0 0
    %153 = vmatprep.subr.bf16.mxu0 0
    %154 = vmatpush2.bf16.msra.mxu0 0
    %155 = vmatprep.subr.bf16.mxu0 0
    %156 = vmatpush2.bf16.msra.mxu0 0
    %157 = vmatprep.subr.bf16.mxu0 0
    %158 = vmatpush2.bf16.msra.mxu0 0
    %159 = vmatprep.subr.bf16.mxu0 0
    %160 = vmatpush2.bf16.msra.mxu0 0
    %161 = vmatprep.subr.bf16.mxu0 0
    %162 = vmatpush2.bf16.msra.mxu0 0
    %163 = vmatprep.subr.bf16.mxu0 0
    %164 = vmatpush2.bf16.msra.mxu0 0
    %165 = vmatprep.mubr.bf16.mxu0 0
    %166 = vmatmul.mubr.bf16.gmra.mxu0 %v118
    %v167 = vpop.f32.mrf.mxu0
    %v168 = vadd.f32 0.0, %v167
    %v169 = vpop.f32.mrf.mxu0
    %v170 = vadd.f32 0.0, %v169
    %v171 = vpop.f32.mrf.mxu0
    %v172 = vpop.f32.mrf.mxu0
    %173 = vdwg.mxu0
    %174 = vmatprep.subr.bf16.mxu0 0
    %175 = vmatpush1.bf16.msra.mxu0 0
    %176 = vmatprep.subr.bf16.mxu0 0
    %177 = vmatpush1.bf16.msra.mxu0 0
    %178 = vmatprep.subr.bf16.mxu0 0
    %179 = vmatpush1.bf16.msra.mxu0 0
    %180 = vmatprep.subr.bf16.mxu0 0
    %181 = vmatpush1.bf16.msra.mxu0 0
    %182 = vmatprep.subr.bf16.mxu0 0
    %183 = vmatpush1.bf16.msra.mxu0 0
    %184 = vmatprep.subr.bf16.mxu0 0
    %185 = vmatpush1.bf16.msra.mxu0 0
    %186 = vmatprep.subr.bf16.mxu0 %v131
    %187 = vmatpush1.bf16.msra.mxu0 %v128
    %188 = vmatprep.subr.bf16.mxu0 %v107
    %189 = vmatpush1.bf16.msra.mxu0 %v106
    %190 = vmatprep.subr.bf16.mxu0 0
    %191 = vmatpush2.bf16.msra.mxu0 0
    %192 = vmatprep.subr.bf16.mxu0 0
    %193 = vmatpush2.bf16.msra.mxu0 0
    %194 = vmatprep.subr.bf16.mxu0 0
    %195 = vmatpush2.bf16.msra.mxu0 0
    %196 = vmatprep.subr.bf16.mxu0 0
    %197 = vmatpush2.bf16.msra.mxu0 0
    %198 = vmatprep.subr.bf16.mxu0 0
    %199 = vmatpush2.bf16.msra.mxu0 0
    %200 = vmatprep.subr.bf16.mxu0 0
    %201 = vmatpush2.bf16.msra.mxu0 0
    %202 = vmatprep.subr.bf16.mxu0 0
    %203 = vmatpush2.bf16.msra.mxu0 0
    %204 = vmatprep.subr.bf16.mxu0 0
    %205 = vmatpush2.bf16.msra.mxu0 0
    %206 = vmatprep.mubr.bf16.mxu0 0
    %207 = vmatmul.mubr.bf16.gmra.mxu0 %v118
    %v208 = vpop.f32.mrf.mxu0
    %v209 = vadd.f32 0.0, %v208
    %v210 = vpop.f32.mrf.mxu0
    %v211 = vadd.f32 0.0, %v210
    %v212 = vpop.f32.mrf.mxu0
    %v213 = vpop.f32.mrf.mxu0
    %214 = vdwg.mxu0
    %v215 = vrot.slane %v168, 4
    %v216 = vadd.f32 %v168, %v215
    %v217 = vrot.slane %v216, 2
    %v218 = vadd.f32 %v216, %v217
    %v219 = vrot.slane %v218, 1
    %v220 = vadd.f32 %v218, %v219
    %v221 = vrot.slane %v170, 4
    %v222 = vadd.f32 %v170, %v221
    %v223 = vrot.slane %v222, 2
    %v224 = vadd.f32 %v222, %v223
    %v225 = vrot.slane %v224, 1
    %v226 = vadd.f32 %v224, %v225
    %v227 = vrot.slane %v209, 4
    %v228 = vadd.f32 %v209, %v227
    %v229 = vrot.slane %v228, 2
    %v230 = vadd.f32 %v228, %v229
    %v231 = vrot.slane %v230, 1
    %v232 = vadd.f32 %v230, %v231
    %v233 = vrot.slane %v211, 4
    %v234 = vadd.f32 %v211, %v233
    %v235 = vrot.slane %v234, 2
    %v236 = vadd.f32 %v234, %v235
    %v237 = vrot.slane %v236, 1
    %v238 = vadd.f32 %v236, %v237
    %v239 = vrcp.pop 8.0
    %v240 = vmul.f32 %v220, %v239
    %v241 = vmul.f32 %v226, %v239
    %v242 = vmul.f32 %v232, %v239
    %v243 = vmul.f32 %v238, %v239
    %v244 = vsub.f32 %v168, %v240
    %v245 = vsub.f32 %v170, %v241
    %v246 = vsub.f32 %v209, %v242
    %v247 = vsub.f32 %v211, %v243
    %v248 = vmul.f32 %v244, %v244
    %v249 = vmul.f32 %v245, %v245
    %v250 = vmul.f32 %v246, %v246
    %v251 = vmul.f32 %v247, %v247
    %v252 = vrot.slane %v248, 4
    %v253 = vadd.f32 %v248, %v252
    %v254 = vrot.slane %v253, 2
    %v255 = vadd.f32 %v253, %v254
    %v256 = vrot.slane %v255, 1
    %v257 = vadd.f32 %v255, %v256
    %v258 = vrot.slane %v249, 4
    %v259 = vadd.f32 %v249, %v258
    %v260 = vrot.slane %v259, 2
    %v261 = vadd.f32 %v259, %v260
    %v262 = vrot.slane %v261, 1
    %v263 = vadd.f32 %v261, %v262
    %v264 = vrot.slane %v250, 4
    %v265 = vadd.f32 %v250, %v264
    %v266 = vrot.slane %v265, 2
    %v267 = vadd.f32 %v265, %v266
    %v268 = vrot.slane %v267, 1
    %v269 = vadd.f32 %v267, %v268
    %v270 = vrot.slane %v251, 4
    %v271 = vadd.f32 %v251, %v270
    %v272 = vrot.slane %v271, 2
    %v273 = vadd.f32 %v271, %v272
    %v274 = vrot.slane %v273, 1
    %v275 = vadd.f32 %v273, %v274
    %v276 = vmul.f32 %v257, %v239
    %v277 = vmul.f32 %v263, %v239
    %v278 = vmul.f32 %v269, %v239
    %v279 = vmul.f32 %v275, %v239
    %v280 = vadd.f32 %v276, 1e-05
    %v281 = vadd.f32 %v277, 1e-05
    %v282 = vadd.f32 %v278, 1e-05
    %v283 = vadd.f32 %v279, 1e-05
    %v284 = vrsqrt.pop %v280
    %v285 = vrsqrt.pop %v281
    %v286 = vrsqrt.pop %v282
    %v287 = vrsqrt.pop %v283
    %v292 = vcombine.low %v284, %v285
    %v293 = vcombine.low %v286, %v287
    %v296 = vmul.f32 %v77, %v292
    %v297 = vmul.f32 %v78, %v293
    %v300 = vlaneseq
    %v301 = vshrl.u32 %v300, 7
    %v302 = vsub.s32 0, %v301
    %v303 = vrot.slane %v296, %v302
    %v304 = vlaneseq
    %v305 = vshrl.u32 %v304, 7
    %v306 = vsub.s32 4, %v305
    %v307 = vrot.slane %v296, %v306
    %v308 = vlaneseq
    %v309 = vshrl.u32 %v308, 7
    %v310 = vsub.s32 0, %v309
    %v311 = vrot.slane %v297, %v310
    %v312 = vlaneseq
    %v313 = vshrl.u32 %v312, 7
    %v314 = vsub.s32 4, %v313
    %v315 = vrot.slane %v297, %v314
    %v320 = vlaneseq
    %v321 = vshrl.u32 %v320, 7
    %v322 = vsub.s32 0, %v321
    %v323 = vrot.slane %v303, %v322
    %v324 = vlaneseq
    %v325 = vshrl.u32 %v324, 7
    %v326 = vsub.s32 0, %v325
    %v327 = vrot.slane %v307, %v326
    %v328 = vlaneseq
    %v329 = vshrl.u32 %v328, 7
    %v330 = vsub.s32 0, %v329
    %v331 = vrot.slane %v311, %v330
    %v332 = vlaneseq
    %v333 = vshrl.u32 %v332, 7
    %v334 = vsub.s32 0, %v333
    %v335 = vrot.slane %v315, %v334
    %v336 = vmul.f32 %v244, %v323
    %v337 = vmul.f32 %v245, %v327
    %v338 = vmul.f32 %v246, %v331
    %v339 = vmul.f32 %v247, %v335
    %v342 = vlaneseq
    %v343 = vshrl.u32 %v342, 7
    %v344 = vsub.s32 1, %v343
    %v345 = vrot.slane %v77, %v344
    %v346 = vlaneseq
    %v347 = vshrl.u32 %v346, 7
    %v348 = vsub.s32 5, %v347
    %v349 = vrot.slane %v77, %v348
    %v350 = vlaneseq
    %v351 = vshrl.u32 %v350, 7
    %v352 = vsub.s32 1, %v351
    %v353 = vrot.slane %v78, %v352
    %v354 = vlaneseq
    %v355 = vshrl.u32 %v354, 7
    %v356 = vsub.s32 5, %v355
    %v357 = vrot.slane %v78, %v356
    %v362 = vlaneseq
    %v363 = vshrl.u32 %v362, 7
    %v364 = vsub.s32 1, %v363
    %v365 = vrot.slane %v345, %v364
    %v366 = vlaneseq
    %v367 = vshrl.u32 %v366, 7
    %v368 = vsub.s32 1, %v367
    %v369 = vrot.slane %v349, %v368
    %v370 = vlaneseq
    %v371 = vshrl.u32 %v370, 7
    %v372 = vsub.s32 1, %v371
    %v373 = vrot.slane %v353, %v372
    %v374 = vlaneseq
    %v375 = vshrl.u32 %v374, 7
    %v376 = vsub.s32 1, %v375
    %v377 = vrot.slane %v357, %v376
    %v378 = vadd.f32 %v336, %v365
    %v379 = vadd.f32 %v337, %v369
    %v380 = vadd.f32 %v338, %v373
    %v381 = vadd.f32 %v339, %v377
    %v382 = vmax.f32 %v378, 0.0
    %v383 = vmax.f32 %v379, 0.0
    %v384 = vmax.f32 %v380, 0.0
    %v385 = vmax.f32 %v381, 0.0
    %v386 = vld [vmem:[#allocation4] sm:$0xff]
    %v387 = vld [vmem:[#allocation4 + $0x8] sm:$0xff]
    %v388 = vld [vmem:[#allocation4 + $0x10] sm:$0xff]
    %v389 = vld [vmem:[#allocation4 + $0x18] sm:$0xff]
    %v390 = vld [vmem:[#allocation4 + $0x20] sm:$0xff]
    %v391 = vld [vmem:[#allocation4 + $0x28] sm:$0xff]
    %v392 = vld [vmem:[#allocation4 + $0x30] sm:$0xff]
    %v393 = vld [vmem:[#allocation4 + $0x38] sm:$0xff]
    %v394 = vld [vmem:[#allocation4 + $0x40] sm:$0xff]
    %v395 = vld [vmem:[#allocation4 + $0x48] sm:$0xff]
    %v396 = vld [vmem:[#allocation4 + $0x50] sm:$0xff]
    %v397 = vld [vmem:[#allocation4 + $0x58] sm:$0xff]
    %v398 = vld [vmem:[#allocation4 + $0x60] sm:$0xff]
    %v399 = vld [vmem:[#allocation4 + $0x68] sm:$0xff]
    %v400 = vld [vmem:[#allocation4 + $0x70] sm:$0xff]
    %v401 = vld [vmem:[#allocation4 + $0x78] sm:$0xff]
    %v402 = vld [vmem:[#allocation4 + $0x80] sm:$0xff]
    %v403 = vld [vmem:[#allocation4 + $0x88] sm:$0xff]
    %v404 = vld [vmem:[#allocation4 + $0x90] sm:$0xff]
    %v405 = vld [vmem:[#allocation4 + $0x98] sm:$0xff]
    %v406 = vld [vmem:[#allocation4 + $0xa0] sm:$0xff]
    %v407 = vld [vmem:[#allocation4 + $0xa8] sm:$0xff]
    %v408 = vld [vmem:[#allocation4 + $0xb0] sm:$0xff]
    %v409 = vld [vmem:[#allocation4 + $0xb8] sm:$0xff]
    %v410 = vld [vmem:[#allocation4 + $0xc0] sm:$0xff]
    %v411 = vld [vmem:[#allocation4 + $0xc8] sm:$0xff]
    %v412 = vld [vmem:[#allocation4 + $0xd0] sm:$0xff]
    %v413 = vld [vmem:[#allocation4 + $0xd8] sm:$0xff]
    %v414 = vld [vmem:[#allocation4 + $0xe0] sm:$0xff]
    %v415 = vld [vmem:[#allocation4 + $0xe8] sm:$0xff]
    %v416 = vld [vmem:[#allocation4 + $0xf0] sm:$0xff]
    %v417 = vld [vmem:[#allocation4 + $0xf8] sm:$0xff]
    %v418 = vld [vmem:[#allocation4 + $0x100] sm:$0xff]
    %v419 = vld [vmem:[#allocation4 + $0x108] sm:$0xff]
    %v420 = vld [vmem:[#allocation4 + $0x110] sm:$0xff]
    %v421 = vld [vmem:[#allocation4 + $0x118] sm:$0xff]
    %v422 = vld [vmem:[#allocation4 + $0x120] sm:$0xff]
    %v423 = vld [vmem:[#allocation4 + $0x128] sm:$0xff]
    %v424 = vld [vmem:[#allocation4 + $0x130] sm:$0xff]
    %v425 = vld [vmem:[#allocation4 + $0x138] sm:$0xff]
    %v426 = vld [vmem:[#allocation4 + $0x140] sm:$0xff]
    %v427 = vld [vmem:[#allocation4 + $0x148] sm:$0xff]
    %v428 = vld [vmem:[#allocation4 + $0x150] sm:$0xff]
    %v429 = vld [vmem:[#allocation4 + $0x158] sm:$0xff]
    %v430 = vld [vmem:[#allocation4 + $0x160] sm:$0xff]
    %v431 = vld [vmem:[#allocation4 + $0x168] sm:$0xff]
    %v432 = vld [vmem:[#allocation4 + $0x170] sm:$0xff]
    %v433 = vld [vmem:[#allocation4 + $0x178] sm:$0xff]
    %v434 = vld [vmem:[#allocation4 + $0x180] sm:$0xff]
    %v435 = vld [vmem:[#allocation4 + $0x188] sm:$0xff]
    %v436 = vld [vmem:[#allocation4 + $0x190] sm:$0xff]
    %v437 = vld [vmem:[#allocation4 + $0x198] sm:$0xff]
    %v438 = vld [vmem:[#allocation4 + $0x1a0] sm:$0xff]
    %v439 = vld [vmem:[#allocation4 + $0x1a8] sm:$0xff]
    %v440 = vld [vmem:[#allocation4 + $0x1b0] sm:$0xff]
    %v441 = vld [vmem:[#allocation4 + $0x1b8] sm:$0xff]
    %v442 = vld [vmem:[#allocation4 + $0x1c0] sm:$0xff]
    %v443 = vld [vmem:[#allocation4 + $0x1c8] sm:$0xff]
    %v444 = vld [vmem:[#allocation4 + $0x1d0] sm:$0xff]
    %v445 = vld [vmem:[#allocation4 + $0x1d8] sm:$0xff]
    %v446 = vld [vmem:[#allocation4 + $0x1e0] sm:$0xff]
    %v447 = vld [vmem:[#allocation4 + $0x1e8] sm:$0xff]
    %v448 = vld [vmem:[#allocation4 + $0x1f0] sm:$0xff]
    %v449 = vld [vmem:[#allocation4 + $0x1f8] sm:$0xff]
    %v450 = vunpack.c.l.s8.bf16 %v386
    %v451 = vunpack.c.l.s8.bf16 %v387
    %v452 = vunpack.c.l.s8.bf16 %v388
    %v453 = vunpack.c.l.s8.bf16 %v389
    %v454 = vunpack.c.h.s8.bf16 %v386
    %v455 = vunpack.c.h.s8.bf16 %v387
    %v456 = vunpack.c.h.s8.bf16 %v388
    %v457 = vunpack.c.h.s8.bf16 %v389
    %v458 = vunpack.c.l.s8.bf16 %v390
    %v459 = vunpack.c.l.s8.bf16 %v391
    %v460 = vunpack.c.l.s8.bf16 %v392
    %v461 = vunpack.c.l.s8.bf16 %v393
    %v462 = vunpack.c.h.s8.bf16 %v390
    %v463 = vunpack.c.h.s8.bf16 %v391
    %v464 = vunpack.c.h.s8.bf16 %v392
    %v465 = vunpack.c.h.s8.bf16 %v393
    %v466 = vunpack.c.l.s8.bf16 %v394
    %v467 = vunpack.c.l.s8.bf16 %v395
    %v468 = vunpack.c.l.s8.bf16 %v396
    %v469 = vunpack.c.l.s8.bf16 %v397
    %v470 = vunpack.c.h.s8.bf16 %v394
    %v471 = vunpack.c.h.s8.bf16 %v395
    %v472 = vunpack.c.h.s8.bf16 %v396
    %v473 = vunpack.c.h.s8.bf16 %v397
    %v474 = vunpack.c.l.s8.bf16 %v398
    %v475 = vunpack.c.l.s8.bf16 %v399
    %v476 = vunpack.c.l.s8.bf16 %v400
    %v477 = vunpack.c.l.s8.bf16 %v401
    %v478 = vunpack.c.h.s8.bf16 %v398
    %v479 = vunpack.c.h.s8.bf16 %v399
    %v480 = vunpack.c.h.s8.bf16 %v400
    %v481 = vunpack.c.h.s8.bf16 %v401
    %v482 = vunpack.c.l.s8.bf16 %v402
    %v483 = vunpack.c.l.s8.bf16 %v403
    %v484 = vunpack.c.l.s8.bf16 %v404
    %v485 = vunpack.c.l.s8.bf16 %v405
    %v486 = vunpack.c.h.s8.bf16 %v402
    %v487 = vunpack.c.h.s8.bf16 %v403
    %v488 = vunpack.c.h.s8.bf16 %v404
    %v489 = vunpack.c.h.s8.bf16 %v405
    %v490 = vunpack.c.l.s8.bf16 %v406
    %v491 = vunpack.c.l.s8.bf16 %v407
    %v492 = vunpack.c.l.s8.bf16 %v408
    %v493 = vunpack.c.l.s8.bf16 %v409
    %v494 = vunpack.c.h.s8.bf16 %v406
    %v495 = vunpack.c.h.s8.bf16 %v407
    %v496 = vunpack.c.h.s8.bf16 %v408
    %v497 = vunpack.c.h.s8.bf16 %v409
    %v498 = vunpack.c.l.s8.bf16 %v410
    %v499 = vunpack.c.l.s8.bf16 %v411
    %v500 = vunpack.c.l.s8.bf16 %v412
    %v501 = vunpack.c.l.s8.bf16 %v413
    %v502 = vunpack.c.h.s8.bf16 %v410
    %v503 = vunpack.c.h.s8.bf16 %v411
    %v504 = vunpack.c.h.s8.bf16 %v412
    %v505 = vunpack.c.h.s8.bf16 %v413
    %v506 = vunpack.c.l.s8.bf16 %v414
    %v507 = vunpack.c.l.s8.bf16 %v415
    %v508 = vunpack.c.l.s8.bf16 %v416
    %v509 = vunpack.c.l.s8.bf16 %v417
    %v510 = vunpack.c.h.s8.bf16 %v414
    %v511 = vunpack.c.h.s8.bf16 %v415
    %v512 = vunpack.c.h.s8.bf16 %v416
    %v513 = vunpack.c.h.s8.bf16 %v417
    %v514 = vunpack.c.l.s8.bf16 %v418
    %v515 = vunpack.c.l.s8.bf16 %v419
    %v516 = vunpack.c.l.s8.bf16 %v420
    %v517 = vunpack.c.l.s8.bf16 %v421
    %v518 = vunpack.c.h.s8.bf16 %v418
    %v519 = vunpack.c.h.s8.bf16 %v419
    %v520 = vunpack.c.h.s8.bf16 %v420
    %v521 = vunpack.c.h.s8.bf16 %v421
    %v522 = vunpack.c.l.s8.bf16 %v422
    %v523 = vunpack.c.l.s8.bf16 %v423
    %v524 = vunpack.c.l.s8.bf16 %v424
    %v525 = vunpack.c.l.s8.bf16 %v425
    %v526 = vunpack.c.h.s8.bf16 %v422
    %v527 = vunpack.c.h.s8.bf16 %v423
    %v528 = vunpack.c.h.s8.bf16 %v424
    %v529 = vunpack.c.h.s8.bf16 %v425
    %v530 = vunpack.c.l.s8.bf16 %v426
    %v531 = vunpack.c.l.s8.bf16 %v427
    %v532 = vunpack.c.l.s8.bf16 %v428
    %v533 = vunpack.c.l.s8.bf16 %v429
    %v534 = vunpack.c.h.s8.bf16 %v426
    %v535 = vunpack.c.h.s8.bf16 %v427
    %v536 = vunpack.c.h.s8.bf16 %v428
    %v537 = vunpack.c.h.s8.bf16 %v429
    %v538 = vunpack.c.l.s8.bf16 %v430
    %v539 = vunpack.c.l.s8.bf16 %v431
    %v540 = vunpack.c.l.s8.bf16 %v432
    %v541 = vunpack.c.l.s8.bf16 %v433
    %v542 = vunpack.c.h.s8.bf16 %v430
    %v543 = vunpack.c.h.s8.bf16 %v431
    %v544 = vunpack.c.h.s8.bf16 %v432
    %v545 = vunpack.c.h.s8.bf16 %v433
    %v546 = vunpack.c.l.s8.bf16 %v434
    %v547 = vunpack.c.l.s8.bf16 %v435
    %v548 = vunpack.c.l.s8.bf16 %v436
    %v549 = vunpack.c.l.s8.bf16 %v437
    %v550 = vunpack.c.h.s8.bf16 %v434
    %v551 = vunpack.c.h.s8.bf16 %v435
    %v552 = vunpack.c.h.s8.bf16 %v436
    %v553 = vunpack.c.h.s8.bf16 %v437
    %v554 = vunpack.c.l.s8.bf16 %v438
    %v555 = vunpack.c.l.s8.bf16 %v439
    %v556 = vunpack.c.l.s8.bf16 %v440
    %v557 = vunpack.c.l.s8.bf16 %v441
    %v558 = vunpack.c.h.s8.bf16 %v438
    %v559 = vunpack.c.h.s8.bf16 %v439
    %v560 = vunpack.c.h.s8.bf16 %v440
    %v561 = vunpack.c.h.s8.bf16 %v441
    %v562 = vunpack.c.l.s8.bf16 %v442
    %v563 = vunpack.c.l.s8.bf16 %v443
    %v564 = vunpack.c.l.s8.bf16 %v444
    %v565 = vunpack.c.l.s8.bf16 %v445
    %v566 = vunpack.c.h.s8.bf16 %v442
    %v567 = vunpack.c.h.s8.bf16 %v443
    %v568 = vunpack.c.h.s8.bf16 %v444
    %v569 = vunpack.c.h.s8.bf16 %v445
    %v570 = vunpack.c.l.s8.bf16 %v446
    %v571 = vunpack.c.l.s8.bf16 %v447
    %v572 = vunpack.c.l.s8.bf16 %v448
    %v573 = vunpack.c.l.s8.bf16 %v449
    %v574 = vunpack.c.h.s8.bf16 %v446
    %v575 = vunpack.c.h.s8.bf16 %v447
    %v576 = vunpack.c.h.s8.bf16 %v448
    %v577 = vunpack.c.h.s8.bf16 %v449
    %v578 = vpack.c.bf16 %v382, %v382
    %v579 = vpack.c.bf16 %v383, %v383
    %v580 = vpack.c.bf16 %v384, %v384
    %v581 = vpack.c.bf16 %v385, %v385
    %582 = vmatprep.subr.bf16.mxu0 %v479
    %583 = vmatpush1.bf16.msra.mxu0 %v478
    %584 = vmatprep.subr.bf16.mxu0 %v475
    %585 = vmatpush1.bf16.msra.mxu0 %v474
    %586 = vmatprep.subr.bf16.mxu0 %v471
    %587 = vmatpush1.bf16.msra.mxu0 %v470
    %588 = vmatprep.subr.bf16.mxu0 %v467
    %589 = vmatpush1.bf16.msra.mxu0 %v466
    %590 = vmatprep.subr.bf16.mxu0 %v463
    %591 = vmatpush1.bf16.msra.mxu0 %v462
    %592 = vmatprep.subr.bf16.mxu0 %v459
    %593 = vmatpush1.bf16.msra.mxu0 %v458
    %594 = vmatprep.subr.bf16.mxu0 %v455
    %595 = vmatpush1.bf16.msra.mxu0 %v454
    %596 = vmatprep.subr.bf16.mxu0 %v451
    %597 = vmatpush1.bf16.msra.mxu0 %v450
    %598 = vmatprep.subr.bf16.mxu0 %v511
    %599 = vmatpush2.bf16.msra.mxu0 %v510
    %600 = vmatprep.subr.bf16.mxu0 %v507
    %601 = vmatpush2.bf16.msra.mxu0 %v506
    %602 = vmatprep.subr.bf16.mxu0 %v503
    %603 = vmatpush2.bf16.msra.mxu0 %v502
    %604 = vmatprep.subr.bf16.mxu0 %v499
    %605 = vmatpush2.bf16.msra.mxu0 %v498
    %606 = vmatprep.subr.bf16.mxu0 %v495
    %607 = vmatpush2.bf16.msra.mxu0 %v494
    %608 = vmatprep.subr.bf16.mxu0 %v491
    %609 = vmatpush2.bf16.msra.mxu0 %v490
    %610 = vmatprep.subr.bf16.mxu0 %v487
    %611 = vmatpush2.bf16.msra.mxu0 %v486
    %612 = vmatprep.subr.bf16.mxu0 %v483
    %613 = vmatpush2.bf16.msra.mxu0 %v482
    %614 = vmatprep.mubr.bf16.mxu0 %v579
    %615 = vmatmul.mubr.bf16.gmra.mxu0 %v578
    %v616 = vpop.f32.mrf.mxu0
    %v617 = vadd.f32 0.0, %v616
    %v618 = vpop.f32.mrf.mxu0
    %v619 = vadd.f32 0.0, %v618
    %v620 = vpop.f32.mrf.mxu0
    %v621 = vpop.f32.mrf.mxu0
    %622 = vdwg.mxu0
    %623 = vmatprep.subr.bf16.mxu0 %v543
    %624 = vmatpush1.bf16.msra.mxu0 %v542
    %625 = vmatprep.subr.bf16.mxu0 %v539
    %626 = vmatpush1.bf16.msra.mxu0 %v538
    %627 = vmatprep.subr.bf16.mxu0 %v535
    %628 = vmatpush1.bf16.msra.mxu0 %v534
    %629 = vmatprep.subr.bf16.mxu0 %v531
    %630 = vmatpush1.bf16.msra.mxu0 %v530
    %631 = vmatprep.subr.bf16.mxu0 %v527
    %632 = vmatpush1.bf16.msra.mxu0 %v526
    %633 = vmatprep.subr.bf16.mxu0 %v523
    %634 = vmatpush1.bf16.msra.mxu0 %v522
    %635 = vmatprep.subr.bf16.mxu0 %v519
    %636 = vmatpush1.bf16.msra.mxu0 %v518
    %637 = vmatprep.subr.bf16.mxu0 %v515
    %638 = vmatpush1.bf16.msra.mxu0 %v514
    %639 = vmatprep.subr.bf16.mxu0 %v575
    %640 = vmatpush2.bf16.msra.mxu0 %v574
    %641 = vmatprep.subr.bf16.mxu0 %v571
    %642 = vmatpush2.bf16.msra.mxu0 %v570
    %643 = vmatprep.subr.bf16.mxu0 %v567
    %644 = vmatpush2.bf16.msra.mxu0 %v566
    %645 = vmatprep.subr.bf16.mxu0 %v563
    %646 = vmatpush2.bf16.msra.mxu0 %v562
    %647 = vmatprep.subr.bf16.mxu0 %v559
    %648 = vmatpush2.bf16.msra.mxu0 %v558
    %649 = vmatprep.subr.bf16.mxu0 %v555
    %650 = vmatpush2.bf16.msra.mxu0 %v554
    %651 = vmatprep.subr.bf16.mxu0 %v551
    %652 = vmatpush2.bf16.msra.mxu0 %v550
    %653 = vmatprep.subr.bf16.mxu0 %v547
    %654 = vmatpush2.bf16.msra.mxu0 %v546
    %655 = vmatprep.mubr.bf16.mxu0 %v581
    %656 = vmatmul.mubr.bf16.gmra.mxu0 %v580
    %v657 = vpop.f32.mrf.mxu0
    %v658 = vadd.f32 %v617, %v657
    %v659 = vpop.f32.mrf.mxu0
    %v660 = vadd.f32 %v619, %v659
    %v661 = vpop.f32.mrf.mxu0
    %v662 = vpop.f32.mrf.mxu0
    %663 = vdwg.mxu0
    %664 = vmatprep.subr.bf16.mxu0 %v481
    %665 = vmatpush1.bf16.msra.mxu0 %v480
    %666 = vmatprep.subr.bf16.mxu0 %v477
    %667 = vmatpush1.bf16.msra.mxu0 %v476
    %668 = vmatprep.subr.bf16.mxu0 %v473
    %669 = vmatpush1.bf16.msra.mxu0 %v472
    %670 = vmatprep.subr.bf16.mxu0 %v469
    %671 = vmatpush1.bf16.msra.mxu0 %v468
    %672 = vmatprep.subr.bf16.mxu0 %v465
    %673 = vmatpush1.bf16.msra.mxu0 %v464
    %674 = vmatprep.subr.bf16.mxu0 %v461
    %675 = vmatpush1.bf16.msra.mxu0 %v460
    %676 = vmatprep.subr.bf16.mxu0 %v457
    %677 = vmatpush1.bf16.msra.mxu0 %v456
    %678 = vmatprep.subr.bf16.mxu0 %v453
    %679 = vmatpush1.bf16.msra.mxu0 %v452
    %680 = vmatprep.subr.bf16.mxu0 %v513
    %681 = vmatpush2.bf16.msra.mxu0 %v512
    %682 = vmatprep.subr.bf16.mxu0 %v509
    %683 = vmatpush2.bf16.msra.mxu0 %v508
    %684 = vmatprep.subr.bf16.mxu0 %v505
    %685 = vmatpush2.bf16.msra.mxu0 %v504
    %686 = vmatprep.subr.bf16.mxu0 %v501
    %687 = vmatpush2.bf16.msra.mxu0 %v500
    %688 = vmatprep.subr.bf16.mxu0 %v497
    %689 = vmatpush2.bf16.msra.mxu0 %v496
    %690 = vmatprep.subr.bf16.mxu0 %v493
    %691 = vmatpush2.bf16.msra.mxu0 %v492
    %692 = vmatprep.subr.bf16.mxu0 %v489
    %693 = vmatpush2.bf16.msra.mxu0 %v488
    %694 = vmatprep.subr.bf16.mxu0 %v485
    %695 = vmatpush2.bf16.msra.mxu0 %v484
    %696 = vmatprep.mubr.bf16.mxu0 %v579
    %697 = vmatmul.mubr.bf16.gmra.mxu0 %v578
    %v698 = vpop.f32.mrf.mxu0
    %v699 = vadd.f32 0.0, %v698
    %v700 = vpop.f32.mrf.mxu0
    %v701 = vadd.f32 0.0, %v700
    %v702 = vpop.f32.mrf.mxu0
    %v703 = vpop.f32.mrf.mxu0
    %704 = vdwg.mxu0
    %705 = vmatprep.subr.bf16.mxu0 %v545
    %706 = vmatpush1.bf16.msra.mxu0 %v544
    %707 = vmatprep.subr.bf16.mxu0 %v541
    %708 = vmatpush1.bf16.msra.mxu0 %v540
    %709 = vmatprep.subr.bf16.mxu0 %v537
    %710 = vmatpush1.bf16.msra.mxu0 %v536
    %711 = vmatprep.subr.bf16.mxu0 %v533
    %712 = vmatpush1.bf16.msra.mxu0 %v532
    %713 = vmatprep.subr.bf16.mxu0 %v529
    %714 = vmatpush1.bf16.msra.mxu0 %v528
    %715 = vmatprep.subr.bf16.mxu0 %v525
    %716 = vmatpush1.bf16.msra.mxu0 %v524
    %717 = vmatprep.subr.bf16.mxu0 %v521
    %718 = vmatpush1.bf16.msra.mxu0 %v520
    %719 = vmatprep.subr.bf16.mxu0 %v517
    %720 = vmatpush1.bf16.msra.mxu0 %v516
    %721 = vmatprep.subr.bf16.mxu0 %v577
    %722 = vmatpush2.bf16.msra.mxu0 %v576
    %723 = vmatprep.subr.bf16.mxu0 %v573
    %724 = vmatpush2.bf16.msra.mxu0 %v572
    %725 = vmatprep.subr.bf16.mxu0 %v569
    %726 = vmatpush2.bf16.msra.mxu0 %v568
    %727 = vmatprep.subr.bf16.mxu0 %v565
    %728 = vmatpush2.bf16.msra.mxu0 %v564
    %729 = vmatprep.subr.bf16.mxu0 %v561
    %730 = vmatpush2.bf16.msra.mxu0 %v560
    %731 = vmatprep.subr.bf16.mxu0 %v557
    %732 = vmatpush2.bf16.msra.mxu0 %v556
    %733 = vmatprep.subr.bf16.mxu0 %v553
    %734 = vmatpush2.bf16.msra.mxu0 %v552
    %735 = vmatprep.subr.bf16.mxu0 %v549
    %736 = vmatpush2.bf16.msra.mxu0 %v548
    %737 = vmatprep.mubr.bf16.mxu0 %v581
    %738 = vmatmul.mubr.bf16.gmra.mxu0 %v580
    %v739 = vpop.f32.mrf.mxu0
    %v740 = vadd.f32 %v699, %v739
    %v741 = vpop.f32.mrf.mxu0
    %v742 = vadd.f32 %v701, %v741
    %v743 = vpop.f32.mrf.mxu0
    %v744 = vpop.f32.mrf.mxu0
    %745 = vdwg.mxu0
    %v746 = vrot.slane %v658, 4
    %v747 = vadd.f32 %v658, %v746
    %v748 = vrot.slane %v747, 2
    %v749 = vadd.f32 %v747, %v748
    %v750 = vrot.slane %v749, 1
    %v751 = vadd.f32 %v749, %v750
    %v752 = vrot.slane %v660, 4
    %v753 = vadd.f32 %v660, %v752
    %v754 = vrot.slane %v753, 2
    %v755 = vadd.f32 %v753, %v754
    %v756 = vrot.slane %v755, 1
    %v757 = vadd.f32 %v755, %v756
    %v758 = vrot.slane %v740, 4
    %v759 = vadd.f32 %v740, %v758
    %v760 = vrot.slane %v759, 2
    %v761 = vadd.f32 %v759, %v760
    %v762 = vrot.slane %v761, 1
    %v763 = vadd.f32 %v761, %v762
    %v764 = vrot.slane %v742, 4
    %v765 = vadd.f32 %v742, %v764
    %v766 = vrot.slane %v765, 2
    %v767 = vadd.f32 %v765, %v766
    %v768 = vrot.slane %v767, 1
    %v769 = vadd.f32 %v767, %v768
    %v770 = vmul.f32 %v751, %v239
    %v771 = vmul.f32 %v757, %v239
    %v772 = vmul.f32 %v763, %v239
    %v773 = vmul.f32 %v769, %v239
    %v774 = vsub.f32 %v658, %v770
    %v775 = vsub.f32 %v660, %v771
    %v776 = vsub.f32 %v740, %v772
    %v777 = vsub.f32 %v742, %v773
    %v778 = vmul.f32 %v774, %v774
    %v779 = vmul.f32 %v775, %v775
    %v780 = vmul.f32 %v776, %v776
    %v781 = vmul.f32 %v777, %v777
    %v782 = vrot.slane %v778, 4
    %v783 = vadd.f32 %v778, %v782
    %v784 = vrot.slane %v783, 2
    %v785 = vadd.f32 %v783, %v784
    %v786 = vrot.slane %v785, 1
    %v787 = vadd.f32 %v785, %v786
    %v788 = vrot.slane %v779, 4
    %v789 = vadd.f32 %v779, %v788
    %v790 = vrot.slane %v789, 2
    %v791 = vadd.f32 %v789, %v790
    %v792 = vrot.slane %v791, 1
    %v793 = vadd.f32 %v791, %v792
    %v794 = vrot.slane %v780, 4
    %v795 = vadd.f32 %v780, %v794
    %v796 = vrot.slane %v795, 2
    %v797 = vadd.f32 %v795, %v796
    %v798 = vrot.slane %v797, 1
    %v799 = vadd.f32 %v797, %v798
    %v800 = vrot.slane %v781, 4
    %v801 = vadd.f32 %v781, %v800
    %v802 = vrot.slane %v801, 2
    %v803 = vadd.f32 %v801, %v802
    %v804 = vrot.slane %v803, 1
    %v805 = vadd.f32 %v803, %v804
    %v806 = vmul.f32 %v787, %v239
    %v807 = vmul.f32 %v793, %v239
    %v808 = vmul.f32 %v799, %v239
    %v809 = vmul.f32 %v805, %v239
    %v810 = vadd.f32 %v806, 1e-05
    %v811 = vadd.f32 %v807, 1e-05
    %v812 = vadd.f32 %v808, 1e-05
    %v813 = vadd.f32 %v809, 1e-05
    %v814 = vrsqrt.pop %v810
    %v815 = vrsqrt.pop %v811
    %v816 = vrsqrt.pop %v812
    %v817 = vrsqrt.pop %v813
    %v822 = vcombine.low %v814, %v815
    %v823 = vcombine.low %v816, %v817
    %v824 = vrot.slane %v822, 6
    %v825 = vrot.slane %v823, 6
    %v828 = vmul.f32 %v77, %v824
    %v829 = vmul.f32 %v78, %v825
    %v832 = vlaneseq
    %v833 = vshrl.u32 %v832, 7
    %v834 = vsub.s32 2, %v833
    %v835 = vrot.slane %v828, %v834
    %v836 = vlaneseq
    %v837 = vshrl.u32 %v836, 7
    %v838 = vsub.s32 6, %v837
    %v839 = vrot.slane %v828, %v838
    %v840 = vlaneseq
    %v841 = vshrl.u32 %v840, 7
    %v842 = vsub.s32 2, %v841
    %v843 = vrot.slane %v829, %v842
    %v844 = vlaneseq
    %v845 = vshrl.u32 %v844, 7
    %v846 = vsub.s32 6, %v845
    %v847 = vrot.slane %v829, %v846
    %v852 = vlaneseq
    %v853 = vshrl.u32 %v852, 7
    %v854 = vsub.s32 2, %v853
    %v855 = vrot.slane %v835, %v854
    %v856 = vlaneseq
    %v857 = vshrl.u32 %v856, 7
    %v858 = vsub.s32 2, %v857
    %v859 = vrot.slane %v839, %v858
    %v860 = vlaneseq
    %v861 = vshrl.u32 %v860, 7
    %v862 = vsub.s32 2, %v861
    %v863 = vrot.slane %v843, %v862
    %v864 = vlaneseq
    %v865 = vshrl.u32 %v864, 7
    %v866 = vsub.s32 2, %v865
    %v867 = vrot.slane %v847, %v866
    %v868 = vmul.f32 %v774, %v855
    %v869 = vmul.f32 %v775, %v859
    %v870 = vmul.f32 %v776, %v863
    %v871 = vmul.f32 %v777, %v867
    %v872 = vlaneseq
    %v873 = vshrl.u32 %v872, 7
    %v874 = vsub.s32 3, %v873
    %v875 = vrot.slane %v77, %v874
    %v876 = vlaneseq
    %v877 = vshrl.u32 %v876, 7
    %v878 = vsub.s32 7, %v877
    %v879 = vrot.slane %v77, %v878
    %v880 = vlaneseq
    %v881 = vshrl.u32 %v880, 7
    %v882 = vsub.s32 3, %v881
    %v883 = vrot.slane %v78, %v882
    %v884 = vlaneseq
    %v885 = vshrl.u32 %v884, 7
    %v886 = vsub.s32 7, %v885
    %v887 = vrot.slane %v78, %v886
    %v892 = vlaneseq
    %v893 = vshrl.u32 %v892, 7
    %v894 = vsub.s32 3, %v893
    %v895 = vrot.slane %v875, %v894
    %v896 = vlaneseq
    %v897 = vshrl.u32 %v896, 7
    %v898 = vsub.s32 3, %v897
    %v899 = vrot.slane %v879, %v898
    %v900 = vlaneseq
    %v901 = vshrl.u32 %v900, 7
    %v902 = vsub.s32 3, %v901
    %v903 = vrot.slane %v883, %v902
    %v904 = vlaneseq
    %v905 = vshrl.u32 %v904, 7
    %v906 = vsub.s32 3, %v905
    %v907 = vrot.slane %v887, %v906
    %v908 = vadd.f32 %v868, %v895
    %v909 = vadd.f32 %v869, %v899
    %v910 = vadd.f32 %v870, %v903
    %v911 = vadd.f32 %v871, %v907
    %v912 = vmax.f32 %v908, 0.0
    %v913 = vmax.f32 %v909, 0.0
    %v914 = vmax.f32 %v910, 0.0
    %v915 = vmax.f32 %v911, 0.0
    %v916 = vpack.c.bf16 %v912, %v912
    %v917 = vpack.c.bf16 %v913, %v913
    %v918 = vpack.c.bf16 %v914, %v914
    %v919 = vpack.c.bf16 %v915, %v915
    %v920 = vld [vmem:[#allocation6] sm:$0xff]
    %v921 = vld [vmem:[#allocation6 + $0x8] sm:$0xff]
    %v922 = vld [vmem:[#allocation6 + $0x10] sm:$0xff]
    %v923 = vld [vmem:[#allocation6 + $0x18] sm:$0xff]
    %v924 = vld [vmem:[#allocation6 + $0x20] sm:$0xff]
    %v925 = vld [vmem:[#allocation6 + $0x28] sm:$0xff]
    %v926 = vld [vmem:[#allocation6 + $0x30] sm:$0xff]
    %v927 = vld [vmem:[#allocation6 + $0x38] sm:$0xff]
    %v928 = vld [vmem:[#allocation6 + $0x40] sm:$0xff]
    %v929 = vld [vmem:[#allocation6 + $0x48] sm:$0xff]
    %v930 = vld [vmem:[#allocation6 + $0x50] sm:$0xff]
    %v931 = vld [vmem:[#allocation6 + $0x58] sm:$0xff]
    %v932 = vld [vmem:[#allocation6 + $0x60] sm:$0xff]
    %v933 = vld [vmem:[#allocation6 + $0x68] sm:$0xff]
    %v934 = vld [vmem:[#allocation6 + $0x70] sm:$0xff]
    %v935 = vld [vmem:[#allocation6 + $0x78] sm:$0xff]
    %v936 = vld [vmem:[#allocation6 + $0x80] sm:$0xff]
    %v937 = vld [vmem:[#allocation6 + $0x88] sm:$0xff]
    %v938 = vld [vmem:[#allocation6 + $0x90] sm:$0xff]
    %v939 = vld [vmem:[#allocation6 + $0x98] sm:$0xff]
    %v940 = vld [vmem:[#allocation6 + $0xa0] sm:$0xff]
    %v941 = vld [vmem:[#allocation6 + $0xa8] sm:$0xff]
    %v942 = vld [vmem:[#allocation6 + $0xb0] sm:$0xff]
    %v943 = vld [vmem:[#allocation6 + $0xb8] sm:$0xff]
    %v944 = vld [vmem:[#allocation6 + $0xc0] sm:$0xff]
    %v945 = vld [vmem:[#allocation6 + $0xc8] sm:$0xff]
    %v946 = vld [vmem:[#allocation6 + $0xd0] sm:$0xff]
    %v947 = vld [vmem:[#allocation6 + $0xd8] sm:$0xff]
    %v948 = vld [vmem:[#allocation6 + $0xe0] sm:$0xff]
    %v949 = vld [vmem:[#allocation6 + $0xe8] sm:$0xff]
    %v950 = vld [vmem:[#allocation6 + $0xf0] sm:$0xff]
    %v951 = vld [vmem:[#allocation6 + $0xf8] sm:$0xff]
    %v952 = vld [vmem:[#allocation6 + $0x100] sm:$0xff]
    %v953 = vld [vmem:[#allocation6 + $0x108] sm:$0xff]
    %v954 = vld [vmem:[#allocation6 + $0x110] sm:$0xff]
    %v955 = vld [vmem:[#allocation6 + $0x118] sm:$0xff]
    %v956 = vld [vmem:[#allocation6 + $0x120] sm:$0xff]
    %v957 = vld [vmem:[#allocation6 + $0x128] sm:$0xff]
    %v958 = vld [vmem:[#allocation6 + $0x130] sm:$0xff]
    %v959 = vld [vmem:[#allocation6 + $0x138] sm:$0xff]
    %v960 = vld [vmem:[#allocation6 + $0x140] sm:$0xff]
    %v961 = vld [vmem:[#allocation6 + $0x148] sm:$0xff]
    %v962 = vld [vmem:[#allocation6 + $0x150] sm:$0xff]
    %v963 = vld [vmem:[#allocation6 + $0x158] sm:$0xff]
    %v964 = vld [vmem:[#allocation6 + $0x160] sm:$0xff]
    %v965 = vld [vmem:[#allocation6 + $0x168] sm:$0xff]
    %v966 = vld [vmem:[#allocation6 + $0x170] sm:$0xff]
    %v967 = vld [vmem:[#allocation6 + $0x178] sm:$0xff]
    %v968 = vld [vmem:[#allocation6 + $0x180] sm:$0xff]
    %v969 = vld [vmem:[#allocation6 + $0x188] sm:$0xff]
    %v970 = vld [vmem:[#allocation6 + $0x190] sm:$0xff]
    %v971 = vld [vmem:[#allocation6 + $0x198] sm:$0xff]
    %v972 = vld [vmem:[#allocation6 + $0x1a0] sm:$0xff]
    %v973 = vld [vmem:[#allocation6 + $0x1a8] sm:$0xff]
    %v974 = vld [vmem:[#allocation6 + $0x1b0] sm:$0xff]
    %v975 = vld [vmem:[#allocation6 + $0x1b8] sm:$0xff]
    %v976 = vld [vmem:[#allocation6 + $0x1c0] sm:$0xff]
    %v977 = vld [vmem:[#allocation6 + $0x1c8] sm:$0xff]
    %v978 = vld [vmem:[#allocation6 + $0x1d0] sm:$0xff]
    %v979 = vld [vmem:[#allocation6 + $0x1d8] sm:$0xff]
    %v980 = vld [vmem:[#allocation6 + $0x1e0] sm:$0xff]
    %v981 = vld [vmem:[#allocation6 + $0x1e8] sm:$0xff]
    %v982 = vld [vmem:[#allocation6 + $0x1f0] sm:$0xff]
    %v983 = vld [vmem:[#allocation6 + $0x1f8] sm:$0xff]
    %v984 = vld [vmem:[%s5] sm:$0x3]
    %v986 = vlaneseq
    %v987 = vshrl.u32 %v986, 7
    %v988 = vsub.s32 0, %v987
    %v989 = vrot.slane %v984, %v988
    %v990 = vlaneseq
    %v991 = vshrl.u32 %v990, 7
    %v992 = vsub.s32 1, %v991
    %v993 = vrot.slane %v984, %v992
    %v1060 = vunpack.c.l.b16 %v920
    %v1061 = vunpack.c.h.b16 %v920
    %v1062 = vunpack.c.l.b16 %v921
    %v1063 = vunpack.c.h.b16 %v921
    %v1064 = vunpack.c.l.b16 %v922
    %v1065 = vunpack.c.h.b16 %v922
    %v1066 = vunpack.c.l.b16 %v923
    %v1067 = vunpack.c.h.b16 %v923
    %v1068 = vunpack.c.l.b16 %v924
    %v1069 = vunpack.c.h.b16 %v924
    %v1070 = vunpack.c.l.b16 %v925
    %v1071 = vunpack.c.h.b16 %v925
    %v1072 = vunpack.c.l.b16 %v926
    %v1073 = vunpack.c.h.b16 %v926
    %v1074 = vunpack.c.l.b16 %v927
    %v1075 = vunpack.c.h.b16 %v927
    %v1076 = vunpack.c.l.b16 %v928
    %v1077 = vunpack.c.h.b16 %v928
    %v1078 = vunpack.c.l.b16 %v929
    %v1079 = vunpack.c.h.b16 %v929
    %v1080 = vunpack.c.l.b16 %v930
    %v1081 = vunpack.c.h.b16 %v930
    %v1082 = vunpack.c.l.b16 %v931
    %v1083 = vunpack.c.h.b16 %v931
    %v1084 = vunpack.c.l.b16 %v932
    %v1085 = vunpack.c.h.b16 %v932
    %v1086 = vunpack.c.l.b16 %v933
    %v1087 = vunpack.c.h.b16 %v933
    %v1088 = vunpack.c.l.b16 %v934
    %v1089 = vunpack.c.h.b16 %v934
    %v1090 = vunpack.c.l.b16 %v935
    %v1091 = vunpack.c.h.b16 %v935
    %v1092 = vunpack.c.l.b16 %v936
    %v1093 = vunpack.c.h.b16 %v936
    %v1094 = vunpack.c.l.b16 %v937
    %v1095 = vunpack.c.h.b16 %v937
    %v1096 = vunpack.c.l.b16 %v938
    %v1097 = vunpack.c.h.b16 %v938
    %v1098 = vunpack.c.l.b16 %v939
    %v1099 = vunpack.c.h.b16 %v939
    %v1100 = vunpack.c.l.b16 %v940
    %v1101 = vunpack.c.h.b16 %v940
    %v1102 = vunpack.c.l.b16 %v941
    %v1103 = vunpack.c.h.b16 %v941
    %v1104 = vunpack.c.l.b16 %v942
    %v1105 = vunpack.c.h.b16 %v942
    %v1106 = vunpack.c.l.b16 %v943
    %v1107 = vunpack.c.h.b16 %v943
    %v1108 = vunpack.c.l.b16 %v944
    %v1109 = vunpack.c.h.b16 %v944
    %v1110 = vunpack.c.l.b16 %v945
    %v1111 = vunpack.c.h.b16 %v945
    %v1112 = vunpack.c.l.b16 %v946
    %v1113 = vunpack.c.h.b16 %v946
    %v1114 = vunpack.c.l.b16 %v947
    %v1115 = vunpack.c.h.b16 %v947
    %v1116 = vunpack.c.l.b16 %v948
    %v1117 = vunpack.c.h.b16 %v948
    %v1118 = vunpack.c.l.b16 %v949
    %v1119 = vunpack.c.h.b16 %v949
    %v1120 = vunpack.c.l.b16 %v950
    %v1121 = vunpack.c.h.b16 %v950
    %v1122 = vunpack.c.l.b16 %v951
    %v1123 = vunpack.c.h.b16 %v951
    %v1124 = vunpack.c.l.b16 %v952
    %v1125 = vunpack.c.h.b16 %v952
    %v1126 = vunpack.c.l.b16 %v953
    %v1127 = vunpack.c.h.b16 %v953
    %v1128 = vunpack.c.l.b16 %v954
    %v1129 = vunpack.c.h.b16 %v954
    %v1130 = vunpack.c.l.b16 %v955
    %v1131 = vunpack.c.h.b16 %v955
    %v1132 = vunpack.c.l.b16 %v956
    %v1133 = vunpack.c.h.b16 %v956
    %v1134 = vunpack.c.l.b16 %v957
    %v1135 = vunpack.c.h.b16 %v957
    %v1136 = vunpack.c.l.b16 %v958
    %v1137 = vunpack.c.h.b16 %v958
    %v1138 = vunpack.c.l.b16 %v959
    %v1139 = vunpack.c.h.b16 %v959
    %v1140 = vunpack.c.l.b16 %v960
    %v1141 = vunpack.c.h.b16 %v960
    %v1142 = vunpack.c.l.b16 %v961
    %v1143 = vunpack.c.h.b16 %v961
    %v1144 = vunpack.c.l.b16 %v962
    %v1145 = vunpack.c.h.b16 %v962
    %v1146 = vunpack.c.l.b16 %v963
    %v1147 = vunpack.c.h.b16 %v963
    %v1148 = vunpack.c.l.b16 %v964
    %v1149 = vunpack.c.h.b16 %v964
    %v1150 = vunpack.c.l.b16 %v965
    %v1151 = vunpack.c.h.b16 %v965
    %v1152 = vunpack.c.l.b16 %v966
    %v1153 = vunpack.c.h.b16 %v966
    %v1154 = vunpack.c.l.b16 %v967
    %v1155 = vunpack.c.h.b16 %v967
    %v1156 = vunpack.c.l.b16 %v968
    %v1157 = vunpack.c.h.b16 %v968
    %v1158 = vunpack.c.l.b16 %v969
    %v1159 = vunpack.c.h.b16 %v969
    %v1160 = vunpack.c.l.b16 %v970
    %v1161 = vunpack.c.h.b16 %v970
    %v1162 = vunpack.c.l.b16 %v971
    %v1163 = vunpack.c.h.b16 %v971
    %v1164 = vunpack.c.l.b16 %v972
    %v1165 = vunpack.c.h.b16 %v972
    %v1166 = vunpack.c.l.b16 %v973
    %v1167 = vunpack.c.h.b16 %v973
    %v1168 = vunpack.c.l.b16 %v974
    %v1169 = vunpack.c.h.b16 %v974
    %v1170 = vunpack.c.l.b16 %v975
    %v1171 = vunpack.c.h.b16 %v975
    %v1172 = vunpack.c.l.b16 %v976
    %v1173 = vunpack.c.h.b16 %v976
    %v1174 = vunpack.c.l.b16 %v977
    %v1175 = vunpack.c.h.b16 %v977
    %v1176 = vunpack.c.l.b16 %v978
    %v1177 = vunpack.c.h.b16 %v978
    %v1178 = vunpack.c.l.b16 %v979
    %v1179 = vunpack.c.h.b16 %v979
    %v1180 = vunpack.c.l.b16 %v980
    %v1181 = vunpack.c.h.b16 %v980
    %v1182 = vunpack.c.l.b16 %v981
    %v1183 = vunpack.c.h.b16 %v981
    %v1184 = vunpack.c.l.b16 %v982
    %v1185 = vunpack.c.h.b16 %v982
    %v1186 = vunpack.c.l.b16 %v983
    %v1187 = vunpack.c.h.b16 %v983
    %v1188 = vpack.c.b16 %v1062, %v1060
    %v1189 = vpack.c.b16 %v1063, %v1061
    %v1190 = vpack.c.b16 %v1066, %v1064
    %v1191 = vpack.c.b16 %v1067, %v1065
    %v1192 = vpack.c.b16 %v1070, %v1068
    %v1193 = vpack.c.b16 %v1071, %v1069
    %v1194 = vpack.c.b16 %v1074, %v1072
    %v1195 = vpack.c.b16 %v1075, %v1073
    %v1196 = vpack.c.b16 %v1078, %v1076
    %v1197 = vpack.c.b16 %v1079, %v1077
    %v1198 = vpack.c.b16 %v1082, %v1080
    %v1199 = vpack.c.b16 %v1083, %v1081
    %v1200 = vpack.c.b16 %v1086, %v1084
    %v1201 = vpack.c.b16 %v1087, %v1085
    %v1202 = vpack.c.b16 %v1090, %v1088
    %v1203 = vpack.c.b16 %v1091, %v1089
    %v1204 = vpack.c.b16 %v1094, %v1092
    %v1205 = vpack.c.b16 %v1095, %v1093
    %v1206 = vpack.c.b16 %v1098, %v1096
    %v1207 = vpack.c.b16 %v1099, %v1097
    %v1208 = vpack.c.b16 %v1102, %v1100
    %v1209 = vpack.c.b16 %v1103, %v1101
    %v1210 = vpack.c.b16 %v1106, %v1104
    %v1211 = vpack.c.b16 %v1107, %v1105
    %v1212 = vpack.c.b16 %v1110, %v1108
    %v1213 = vpack.c.b16 %v1111, %v1109
    %v1214 = vpack.c.b16 %v1114, %v1112
    %v1215 = vpack.c.b16 %v1115, %v1113
    %v1216 = vpack.c.b16 %v1118, %v1116
    %v1217 = vpack.c.b16 %v1119, %v1117
    %v1218 = vpack.c.b16 %v1122, %v1120
    %v1219 = vpack.c.b16 %v1123, %v1121
    %v1220 = vpack.c.b16 %v1126, %v1124
    %v1221 = vpack.c.b16 %v1127, %v1125
    %v1222 = vpack.c.b16 %v1130, %v1128
    %v1223 = vpack.c.b16 %v1131, %v1129
    %v1224 = vpack.c.b16 %v1134, %v1132
    %v1225 = vpack.c.b16 %v1135, %v1133
    %v1226 = vpack.c.b16 %v1138, %v1136
    %v1227 = vpack.c.b16 %v1139, %v1137
    %v1228 = vpack.c.b16 %v1142, %v1140
    %v1229 = vpack.c.b16 %v1143, %v1141
    %v1230 = vpack.c.b16 %v1146, %v1144
    %v1231 = vpack.c.b16 %v1147, %v1145
    %v1232 = vpack.c.b16 %v1150, %v1148
    %v1233 = vpack.c.b16 %v1151, %v1149
    %v1234 = vpack.c.b16 %v1154, %v1152
    %v1235 = vpack.c.b16 %v1155, %v1153
    %v1236 = vpack.c.b16 %v1158, %v1156
    %v1237 = vpack.c.b16 %v1159, %v1157
    %v1238 = vpack.c.b16 %v1162, %v1160
    %v1239 = vpack.c.b16 %v1163, %v1161
    %v1240 = vpack.c.b16 %v1166, %v1164
    %v1241 = vpack.c.b16 %v1167, %v1165
    %v1242 = vpack.c.b16 %v1170, %v1168
    %v1243 = vpack.c.b16 %v1171, %v1169
    %v1244 = vpack.c.b16 %v1174, %v1172
    %v1245 = vpack.c.b16 %v1175, %v1173
    %v1246 = vpack.c.b16 %v1178, %v1176
    %v1247 = vpack.c.b16 %v1179, %v1177
    %v1248 = vpack.c.b16 %v1182, %v1180
    %v1249 = vpack.c.b16 %v1183, %v1181
    %v1250 = vpack.c.b16 %v1186, %v1184
    %v1251 = vpack.c.b16 %v1187, %v1185
    %1316 = vmatprep.subr.bf16.mxu0 %v1203
    %1317 = vmatpush1.bf16.msra.mxu0 %v1202
    %1318 = vmatprep.subr.bf16.mxu0 %v1201
    %1319 = vmatpush1.bf16.msra.mxu0 %v1200
    %1320 = vmatprep.subr.bf16.mxu0 %v1199
    %1321 = vmatpush1.bf16.msra.mxu0 %v1198
    %1322 = vmatprep.subr.bf16.mxu0 %v1197
    %1323 = vmatpush1.bf16.msra.mxu0 %v1196
    %1324 = vmatprep.subr.bf16.mxu0 %v1195
    %1325 = vmatpush1.bf16.msra.mxu0 %v1194
    %1326 = vmatprep.subr.bf16.mxu0 %v1193
    %1327 = vmatpush1.bf16.msra.mxu0 %v1192
    %1328 = vmatprep.subr.bf16.mxu0 %v1191
    %1329 = vmatpush1.bf16.msra.mxu0 %v1190
    %1330 = vmatprep.subr.bf16.mxu0 %v1189
    %1331 = vmatpush1.bf16.msra.mxu0 %v1188
    %1332 = vmatprep.subr.bf16.mxu0 %v1219
    %1333 = vmatpush2.bf16.msra.mxu0 %v1218
    %1334 = vmatprep.subr.bf16.mxu0 %v1217
    %1335 = vmatpush2.bf16.msra.mxu0 %v1216
    %1336 = vmatprep.subr.bf16.mxu0 %v1215
    %1337 = vmatpush2.bf16.msra.mxu0 %v1214
    %1338 = vmatprep.subr.bf16.mxu0 %v1213
    %1339 = vmatpush2.bf16.msra.mxu0 %v1212
    %1340 = vmatprep.subr.bf16.mxu0 %v1211
    %1341 = vmatpush2.bf16.msra.mxu0 %v1210
    %1342 = vmatprep.subr.bf16.mxu0 %v1209
    %1343 = vmatpush2.bf16.msra.mxu0 %v1208
    %1344 = vmatprep.subr.bf16.mxu0 %v1207
    %1345 = vmatpush2.bf16.msra.mxu0 %v1206
    %1346 = vmatprep.subr.bf16.mxu0 %v1205
    %1347 = vmatpush2.bf16.msra.mxu0 %v1204
    %1348 = vmatprep.mubr.bf16.mxu0 %v917
    %1349 = vmatmul.mubr.bf16.gmra.mxu0 %v916
    %v1350 = vpop.f32.mrf.mxu0
    %v1351 = vadd.f32 %v989, %v1350
    %v1352 = vpop.f32.mrf.mxu0
    %v1353 = vadd.f32 %v993, %v1352
    %v1354 = vpop.f32.mrf.mxu0
    %v1355 = vpop.f32.mrf.mxu0
    %1356 = vdwg.mxu0
    %1357 = vmatprep.subr.bf16.mxu0 %v1235
    %1358 = vmatpush1.bf16.msra.mxu0 %v1234
    %1359 = vmatprep.subr.bf16.mxu0 %v1233
    %1360 = vmatpush1.bf16.msra.mxu0 %v1232
    %1361 = vmatprep.subr.bf16.mxu0 %v1231
    %1362 = vmatpush1.bf16.msra.mxu0 %v1230
    %1363 = vmatprep.subr.bf16.mxu0 %v1229
    %1364 = vmatpush1.bf16.msra.mxu0 %v1228
    %1365 = vmatprep.subr.bf16.mxu0 %v1227
    %1366 = vmatpush1.bf16.msra.mxu0 %v1226
    %1367 = vmatprep.subr.bf16.mxu0 %v1225
    %1368 = vmatpush1.bf16.msra.mxu0 %v1224
    %1369 = vmatprep.subr.bf16.mxu0 %v1223
    %1370 = vmatpush1.bf16.msra.mxu0 %v1222
    %1371 = vmatprep.subr.bf16.mxu0 %v1221
    %1372 = vmatpush1.bf16.msra.mxu0 %v1220
    %1373 = vmatprep.subr.bf16.mxu0 %v1251
    %1374 = vmatpush2.bf16.msra.mxu0 %v1250
    %1375 = vmatprep.subr.bf16.mxu0 %v1249
    %1376 = vmatpush2.bf16.msra.mxu0 %v1248
    %1377 = vmatprep.subr.bf16.mxu0 %v1247
    %1378 = vmatpush2.bf16.msra.mxu0 %v1246
    %1379 = vmatprep.subr.bf16.mxu0 %v1245
    %1380 = vmatpush2.bf16.msra.mxu0 %v1244
    %1381 = vmatprep.subr.bf16.mxu0 %v1243
    %1382 = vmatpush2.bf16.msra.mxu0 %v1242
    %1383 = vmatprep.subr.bf16.mxu0 %v1241
    %1384 = vmatpush2.bf16.msra.mxu0 %v1240
    %1385 = vmatprep.subr.bf16.mxu0 %v1239
    %1386 = vmatpush2.bf16.msra.mxu0 %v1238
    %1387 = vmatprep.subr.bf16.mxu0 %v1237
    %1388 = vmatpush2.bf16.msra.mxu0 %v1236
    %1389 = vmatprep.mubr.bf16.mxu0 %v919
    %1390 = vmatmul.mubr.bf16.gmra.mxu0 %v918
    %v1391 = vpop.f32.mrf.mxu0
    %v1392 = vadd.f32 %v1351, %v1391
    %v1393 = vpop.f32.mrf.mxu0
    %v1394 = vadd.f32 %v1353, %v1393
    %v1395 = vpop.f32.mrf.mxu0
    %v1396 = vpop.f32.mrf.mxu0
    %1397 = vdwg.mxu0
    %v1398 = vmul.f32 %v1394, 1.442695
    %v1399 = vpow.pop %v1398
    %v1400 = vadd.f32 %v1399, 1e-09
    %v1401 = vadd.f32 %v1400, 1.0
    %v1402 = vrcp.pop %v1401
    %v1403 = vmul.f32 %v1401, %v1402
    %v1404 = vsub.f32 2.0, %v1403
    %v1405 = vmul.f32 %v1402, %v1404
    %v1406 = vmul.f32 %v1392, %v1405
    %1407 = vst [vmem:[%s6] sm:$0xff] %v1406
    %v1408 = vmul.f32 %v1400, %v1405
    %v1409 = vrsqrt.pop %v1408
    %v1410 = vmul.f32 %v1408, %v1409
    %vm1411 = vcmp.eq.f32.partialorder %v1408, inf
    %v1412 = vsel %vm1411, %v1408, %v1410
    %vm1413 = vcmp.eq.f32.partialorder %v1408, 0.0
    %v1414 = vand.u32 %v1408, 2147483648
    %v1415 = vsel %vm1413, %v1414, %v1412
    %s1416 = scalar_lea.vmem %s6, 8
    %1417 = vst [vmem:[%s1416] sm:$0xff] %v1415
    // Predicated region
    $region42: #{encoder_b_forward.1} parent=1 // pred_check
      _
    $region43: #{encoder_b_forward.1} parent=1 // pred_check_branch
      %1419 = sbr.rel (0) target = $region45
    $region44: #{encoder_b_forward.1} parent=1 // pred_region
      _
    $region45: #{encoder_b_forward.1} parent=1 // pred_fallthru
      _
    // Predicated region
    $region46: #{encoder_b_forward.1} parent=1 // pred_check
      _
    $region47: #{encoder_b_forward.1} parent=1 // pred_check_branch
      %1421 = sbr.rel (0) target = $region49
    $region48: #{encoder_b_forward.1} parent=1 // pred_region
      _
    $region49: #{encoder_b_forward.1} parent=1 // pred_fallthru
      _
    %1422 = vsyncpa [#allocation3], 1
    %1423 = vsyncpa [#allocation5], 1
    %1424 = vsyncpa [#allocation8], 1

</llo_original>
